<compile_context>
chip_gen: v6e
topology: v6e:2x2x1
jax: 0.10.0
libtpu: 0.0.40
codegen_flags: <defaults>
</compile_context>

<pallas_src>
import jax
import jax.numpy as jnp
import numpy as np
from jax.experimental import pallas as pl
from jax.experimental.pallas import tpu as pltpu


def _round_up(x, m):
    return ((x + m - 1) // m) * m


def _cdiv(a, b):
    return (a + b - 1) // b


def _vmem_limit_bytes():
    """Scoped-VMEM limit for the kernel: ~3/4 of physical VMEM (96 MiB on
    v5e/v6e, 48 MiB on v7x); conservative 48 MiB if the query fails."""
    cap = 64 << 20
    try:
        cap = int(getattr(pltpu.get_tpu_info(), "vmem_capacity_bytes", cap))
    except Exception:
        pass
    return int(min(cap * 3 // 4, 96 << 20))


def _choose_tiles(N, tile_n=None, tile_k=None):
    """Pick (tn, tk, vmem_limit) for the DSM matmul.

    tn (destination / lane tile): multiple of 128, <= 1024, and <= half the
    lane-padded width so the "parallel" j axis has >= 2 steps once the graph
    is big enough (both v7x TensorCores contribute HBM bandwidth).
    tk (source / contraction tile): multiple of 128, as large as the
    double-buffered DSM-tile budget (~half the scoped VMEM limit) allows,
    capped at 2048, so each grid step's DMA dwarfs the fixed step overhead.
    """
    vmem_limit = _vmem_limit_bytes()
    n128 = _round_up(max(N, 1), 128)
    if tile_n is None:
        tile_n = 128 if n128 <= 128 else min(1024, max(128, _round_up(n128 // 2, 128)))
    if tile_k is None:
        dsm_budget = max(4 << 20, vmem_limit // 2)          # bytes for 2x DSM tiles
        tk_vmem = max(128, (dsm_budget // (2 * tile_n * 4)) // 128 * 128)
        tile_k = max(128, min(2048, n128, tk_vmem))
    assert tile_n % 128 == 0 and tile_k % 128 == 0
    return tile_n, tile_k, vmem_limit


def _make_stage1_kernel(N, tk, tn, mask_rows, mask_lanes):
    """GCNConv#1 + linear1 + linear2, emitting masked per-tile row sums.

    grid = (num_j, num_k): j = destination-node tiles (parallel),
                           k = source-node / contraction tiles (arbitrary).
    The DSM input is the RAW (N, N) f32 matrix; boundary tiles are partial and
    masked in-kernel (masking code only emitted when padding actually exists).
    """
    def kernel(params_ref, x_ref, dinv_src_ref, dinv_dst_ref, dsm_ref,
               psum_ref, acc_ref):
        j = pl.program_id(0)
        k = pl.program_id(1)
        nk = pl.num_programs(1)

        w_g1, b_g1 = params_ref[0], params_ref[1]   # affine1 (GCNConv #1)
        w_l1, b_l1 = params_ref[2], params_ref[3]   # linear1
        w_l2, b_l2 = params_ref[4], params_ref[5]   # linear2

        @pl.when(k == 0)
        def _():
            acc_ref[...] = jnp.zeros_like(acc_ref)

        d = dsm_ref[...]                            # (tk, tn) raw DSM tile
        if mask_rows:
            # Out-of-bounds source rows (ragged last k tile) may hold arbitrary
            # bits (possibly NaN); zero them so 0 * garbage never poisons the
            # MXU accumulation.  jnp.where (select), not multiply, on purpose.
            row = jax.lax.broadcasted_iota(jnp.int32, d.shape, 0) + k * tk
            d = jnp.where(row < N, d, 0.0)

        # Source-side normalization folded with the 1x1 GCN weight, then the
        # MXU partial product: acc[b, j] += sum_i (x[b,i] * dinv[i] * w) * DSM[i, j]
        xs = x_ref[...] * (dinv_src_ref[...] * w_g1)
        acc_ref[...] += jnp.dot(xs, d, preferred_element_type=jnp.float32)

        @pl.when(k == nk - 1)
        def _():
            # Destination-side normalization + bias + relu, then the two scalar
            # affine layers (1 -> 1 channels).
            h = jnp.maximum(acc_ref[...] * dinv_dst_ref[...] + b_g1, 0.0)
            h = jnp.maximum(h * w_l1 + b_l1, 0.0)
            h = jnp.maximum(h * w_l2 + b_l2, 0.0)
            if mask_lanes:
                # Exclude padded destination lanes (and sanitize any NaN that
                # out-of-bounds DSM columns produced there) from the row sum.
                lane = jax.lax.broadcasted_iota(jnp.int32, h.shape, 1) + j * tn
                h = jnp.where(lane < N, h, 0.0)
            # Per-tile node sum, broadcast across the 128 output lanes so the
            # store stays lane-dense (wrapper reads lane 0 of each tile).
            psum_ref[...] = jnp.broadcast_to(
                jnp.sum(h, axis=1, keepdims=True), psum_ref.shape)

    return kernel


def policy_forward(x, dsm, params, tile_n=None, tile_k=None):
    """x: (B, N) f32 node features, dsm: (N, N) f32 dense adjacency,
    params: (14,) f32 = 7 layers x (weight, bias), every layer being 1x1.
    tile_n / tile_k: optional overrides of the (lane, contraction) DSM tiles."""
    x = x.astype(jnp.float32)
    dsm = dsm.astype(jnp.float32)
    params = params.astype(jnp.float32)

    B, N = x.shape
    assert dsm.shape == (N, N)

    tn, tk, vmem_limit = _choose_tiles(N, tile_n, tile_k)
    num_j = _cdiv(N, tn)
    num_k = _cdiv(N, tk)
    k_pad = num_k * tk
    j_pad = num_j * tn
    w_pad = max(k_pad, j_pad)

    # ---- GCN#1 symmetric normalization (hoisted; one streaming DSM pass) ----
    # Self-loops are already in the dense edge list, so deg = plain column sums.
    deg = jnp.sum(dsm, axis=0)
    dinv = jnp.where(deg > 0.0, jax.lax.rsqrt(deg), 0.0)

    x_p = jnp.pad(x, ((0, 0), (0, k_pad - N)))              # zeros for padded sources
    dinv_p = jnp.pad(dinv, (0, w_pad - N)).reshape(1, w_pad)  # zeros for padded nodes

    kernel = _make_stage1_kernel(N, tk, tn,
                                 mask_rows=(k_pad > N),
                                 mask_lanes=(j_pad > N))

    psum = pl.pallas_call(
        kernel,
        out_shape=jax.ShapeDtypeStruct((B, num_j * 128), jnp.float32),
        grid=(num_j, num_k),
        in_specs=[
            pl.BlockSpec(memory_space=pltpu.MemorySpace.SMEM),   # 14 scalar params
            pl.BlockSpec((B, tk), lambda j, k: (0, k)),          # x (source tile)
            pl.BlockSpec((1, tk), lambda j, k: (0, k)),          # dinv (source side)
            pl.BlockSpec((1, tn), lambda j, k: (0, j)),          # dinv (dest side)
            pl.BlockSpec((tk, tn), lambda j, k: (k, j)),         # raw f32 DSM tile
        ],
        out_specs=pl.BlockSpec((B, 128), lambda j, k: (0, j)),   # per-tile row sums
        scratch_shapes=[pltpu.VMEM((B, tn), jnp.float32)],       # matmul accumulator
        compiler_params=pltpu.CompilerParams(
            dimension_semantics=("parallel", "arbitrary"),
            vmem_limit_bytes=vmem_limit),
    )(params, x_p, dinv_p, dinv_p, dsm)

    # ---- O(B) epilogue in plain JAX: no (B, N) HBM round-trip, no 2nd kernel.
    # Valid ONLY because GCN#2/#3 have no edge_weight (norm = 1/N) and the
    # channel dim is 1, so their aggregation collapses to the node mean and the
    # softmax over the size-1 channel is identically 1.0.
    node_sum = psum.reshape(B, num_j, 128)[:, :, 0].sum(axis=1)   # (B,)
    w_g2, b_g2, w_g3, b_g3 = params[6], params[7], params[8], params[9]
    w_v, b_v = params[12], params[13]
    m = node_sum * (1.0 / N)                                      # GCN#2 aggregation
    m = jnp.maximum(m * w_g2 + b_g2, 0.0)                         # GCN#2 affine + relu
    m = jnp.maximum(m * w_g3 + b_g3, 0.0)                         # GCN#3 + relu
    state_values = (w_v * jnp.max(m) + b_v).reshape(1, 1, 1)      # max-agg + value head
    action_prob = jnp.ones((B, N, 1), jnp.float32)                # softmax over 1 chan
    return action_prob, state_values


def _policy_ref(x, dsm, params):
    """Pure-JAX reference of the same forward, for correctness checking."""
    (w_g1, b_g1, w_l1, b_l1, w_l2, b_l2, w_g2, b_g2,
     w_g3, b_g3, w_a, b_a, w_v, b_v) = [params[i] for i in range(14)]
    deg = jnp.sum(dsm, axis=0)
    dinv = jnp.where(deg == 0.0, 0.0, jax.lax.rsqrt(deg))
    agg = (x * w_g1 * dinv[None, :]) @ dsm
    h = jax.nn.relu(agg * dinv[None, :] + b_g1)
    h = jax.nn.relu(h * w_l1 + b_l1)
    h = jax.nn.relu(h * w_l2 + b_l2)
    m = jnp.mean(h, axis=1, keepdims=True)
    m = jax.nn.relu(m * w_g2 + b_g2)
    m = jax.nn.relu(m * w_g3 + b_g3)
    act = jnp.ones(x.shape + (1,), jnp.float32)   # softmax over singleton channel
    val = (w_v * jnp.max(m) + b_v).reshape(1, 1, 1)
    return act, val


if __name__ == "__main__":
    key = jax.random.PRNGKey(0)
    fwd = jax.jit(policy_forward, static_argnames=("tile_n", "tile_k"))

    # (B, N, tile_n, tile_k):
    #   (2, 8)            tiny single-tile graph
    #   (2, 300)          ragged, auto tiles (num_j=2, masked boundary)
    #   (2, 300, 128, 128) forced small tiles: multi-j AND multi-k accumulation
    #                      + both masking paths exercised at small N.
    cases = [
        (2, 8, None, None),
        (2, 300, None, None),
        (2, 300, 128, 128),
    ]
    for (B, N, tn_o, tk_o) in cases:
        kx, kd, kp = jax.random.split(jax.random.fold_in(key, N), 3)
        x = jax.random.normal(kx, (B, N), dtype=jnp.float32)        # node features
        dsm = jax.random.uniform(kd, (N, N), dtype=jnp.float32)     # dense DSM
        # 14 deterministic scalar parameters: 7 layers x (weight, bias), all 1x1.
        params = jax.random.uniform(kp, (14,), dtype=jnp.float32,
                                    minval=0.1, maxval=0.9)

        action_prob, state_values = jax.block_until_ready(
            fwd(x, dsm, params, tile_n=tn_o, tile_k=tk_o))
        assert action_prob.shape == (B, N, 1)
        assert state_values.shape == (1, 1, 1)

        ref_act, ref_val = _policy_ref(x, dsm, params)
        np.testing.assert_allclose(np.asarray(action_prob), np.asarray(ref_act),
                                   rtol=1e-3, atol=1e-3)
        np.testing.assert_allclose(np.asarray(state_values), np.asarray(ref_val),
                                   rtol=1e-3, atol=1e-3)

    # TODO(synk): saved_actions / rewards / Categorical sampling are training-loop
    # bookkeeping outside the forward compute and are not ported.
    print("KERNEL_OK")
</pallas_src>

<mosaic_0001>
module attributes {stable_mosaic.version = 11 : i64} {
  func.func @kernel(%arg0: i32, %arg1: i32, %arg2: memref<14xf32, #tpu.memory_space<smem>>, %arg3: memref<2x128xf32, #tpu.memory_space<vmem>>, %arg4: memref<1x128xf32, #tpu.memory_space<vmem>>, %arg5: memref<1x128xf32, #tpu.memory_space<vmem>>, %arg6: memref<128x128xf32, #tpu.memory_space<vmem>>, %arg7: memref<2x128xf32, #tpu.memory_space<vmem>>, %arg8: memref<2x128xf32, #tpu.memory_space<vmem>>) attributes {dimension_semantics = [#tpu.dimension_semantics<parallel>, #tpu.dimension_semantics<arbitrary>], iteration_bounds = array<i64: 1, 1>, scalar_prefetch = 0 : i64, scratch_operands = 1 : i64, tpu.core_type = #tpu.core_type<tc>, window_params = [{transform_indices = @transform_0, window_bounds = array<i64: 14>}, {transform_indices = @transform_1, window_bounds = array<i64: 2, 128>}, {transform_indices = @transform_2, window_bounds = array<i64: 1, 128>}, {transform_indices = @transform_3, window_bounds = array<i64: 1, 128>}, {transform_indices = @transform_4, window_bounds = array<i64: 128, 128>}, {transform_indices = @transform_5, window_bounds = array<i64: 2, 128>}]} {
    %c0 = arith.constant 0 : index
    %0 = memref.load %arg2[%c0] : memref<14xf32, #tpu.memory_space<smem>>
    %c1 = arith.constant 1 : index
    %1 = memref.load %arg2[%c1] : memref<14xf32, #tpu.memory_space<smem>>
    %c2 = arith.constant 2 : index
    %2 = memref.load %arg2[%c2] : memref<14xf32, #tpu.memory_space<smem>>
    %c3 = arith.constant 3 : index
    %3 = memref.load %arg2[%c3] : memref<14xf32, #tpu.memory_space<smem>>
    %c4 = arith.constant 4 : index
    %4 = memref.load %arg2[%c4] : memref<14xf32, #tpu.memory_space<smem>>
    %c5 = arith.constant 5 : index
    %5 = memref.load %arg2[%c5] : memref<14xf32, #tpu.memory_space<smem>>
    %c0_i32 = arith.constant 0 : i32
    %6 = arith.cmpi eq, %arg1, %c0_i32 : i32
    %7 = arith.extui %6 : i1 to i32
    %c0_i32_0 = arith.constant 0 : i32
    %8 = arith.cmpi ne, %7, %c0_i32_0 : i32
    scf.if %8 {
      %cst_14 = arith.constant 0.000000e+00 : f32
      %31 = vector.broadcast %cst_14 : f32 to vector<2x128xf32>
      %c0_15 = arith.constant 0 : index
      %c0_16 = arith.constant 0 : index
      %32 = vector.load %arg8[%c0_15, %c0_16] : memref<2x128xf32, #tpu.memory_space<vmem>>, vector<2x128xf32>
      tpu.vector_store %arg8[%c0_15, %c0_16], %31 {strides = array<i32>} : memref<2x128xf32, #tpu.memory_space<vmem>>, vector<2x128xf32>,
    } else {
    }
    %c0_1 = arith.constant 0 : index
    %c0_2 = arith.constant 0 : index
    %9 = vector.load %arg6[%c0_1, %c0_2] : memref<128x128xf32, #tpu.memory_space<vmem>>, vector<128x128xf32>
    %10 = tpu.iota {dimensions = array<i32: 0>} : vector<128x128xi32>
    %c128_i32 = arith.constant 128 : i32
    %11 = arith.muli %arg1, %c128_i32 : i32
    %12 = vector.broadcast %11 : i32 to vector<128x128xi32>
    %13 = arith.addi %10, %12 : vector<128x128xi32>
    %c8_i32 = arith.constant 8 : i32
    %14 = vector.broadcast %c8_i32 : i32 to vector<128x128xi32>
    %15 = arith.cmpi slt, %13, %14 : vector<128x128xi32>
    %cst = arith.constant 0.000000e+00 : f32
    %16 = vector.broadcast %cst : f32 to vector<128x128xf32>
    %17 = arith.select %15, %9, %16 : vector<128x128xi1>, vector<128x128xf32>
    %c0_3 = arith.constant 0 : index
    %c0_4 = arith.constant 0 : index
    %18 = vector.load %arg3[%c0_3, %c0_4] : memref<2x128xf32, #tpu.memory_space<vmem>>, vector<2x128xf32>
    %c0_5 = arith.constant 0 : index
    %c0_6 = arith.constant 0 : index
    %19 = vector.load %arg4[%c0_5, %c0_6] : memref<1x128xf32, #tpu.memory_space<vmem>>, vector<1x128xf32>
    %20 = vector.broadcast %0 : f32 to vector<1x128xf32>
    %21 = arith.mulf %19, %20 : vector<1x128xf32>
    %22 = vector.broadcast %21 : vector<1x128xf32> to vector<2x128xf32>
    %23 = arith.mulf %18, %22 : vector<2x128xf32>
    %c0_7 = arith.constant 0 : index
    %c0_8 = arith.constant 0 : index
    %24 = vector.load %arg8[%c0_7, %c0_8] : memref<2x128xf32, #tpu.memory_space<vmem>>, vector<2x128xf32>
    %cst_9 = arith.constant dense<0.000000e+00> : vector<2x128xf32>
    %25 = tpu.matmul %23, %17, %cst_9 {dimension_numbers = #tpu.dot_dimension_numbers<[1], [0], [0], [1], [0, 0, 1, 1], [], []>} : vector<2x128xf32>, vector<128x128xf32>, vector<2x128xf32> -> vector<2x128xf32>
    %26 = arith.addf %24, %25 : vector<2x128xf32>
    %c0_10 = arith.constant 0 : index
    %c0_11 = arith.constant 0 : index
    %27 = vector.load %arg8[%c0_10, %c0_11] : memref<2x128xf32, #tpu.memory_space<vmem>>, vector<2x128xf32>
    tpu.vector_store %arg8[%c0_10, %c0_11], %26 {strides = array<i32>} : memref<2x128xf32, #tpu.memory_space<vmem>>, vector<2x128xf32>,
    %c0_i32_12 = arith.constant 0 : i32
    %28 = arith.cmpi eq, %arg1, %c0_i32_12 : i32
    %29 = arith.extui %28 : i1 to i32
    %c0_i32_13 = arith.constant 0 : i32
    %30 = arith.cmpi ne, %29, %c0_i32_13 : i32
    scf.if %30 {
      %c0_14 = arith.constant 0 : index
      %c0_15 = arith.constant 0 : index
      %31 = vector.load %arg8[%c0_14, %c0_15] : memref<2x128xf32, #tpu.memory_space<vmem>>, vector<2x128xf32>
      %c0_16 = arith.constant 0 : index
      %c0_17 = arith.constant 0 : index
      %32 = vector.load %arg5[%c0_16, %c0_17] : memref<1x128xf32, #tpu.memory_space<vmem>>, vector<1x128xf32>
      %33 = vector.broadcast %32 : vector<1x128xf32> to vector<2x128xf32>
      %34 = arith.mulf %31, %33 : vector<2x128xf32>
      %35 = vector.broadcast %1 : f32 to vector<2x128xf32>
      %36 = arith.addf %34, %35 : vector<2x128xf32>
      %cst_18 = arith.constant 0.000000e+00 : f32
      %37 = vector.broadcast %cst_18 : f32 to vector<2x128xf32>
      %38 = arith.maximumf %36, %37 : vector<2x128xf32>
      %39 = vector.broadcast %2 : f32 to vector<2x128xf32>
      %40 = arith.mulf %38, %39 : vector<2x128xf32>
      %41 = vector.broadcast %3 : f32 to vector<2x128xf32>
      %42 = arith.addf %40, %41 : vector<2x128xf32>
      %cst_19 = arith.constant 0.000000e+00 : f32
      %43 = vector.broadcast %cst_19 : f32 to vector<2x128xf32>
      %44 = arith.maximumf %42, %43 : vector<2x128xf32>
      %45 = vector.broadcast %4 : f32 to vector<2x128xf32>
      %46 = arith.mulf %44, %45 : vector<2x128xf32>
      %47 = vector.broadcast %5 : f32 to vector<2x128xf32>
      %48 = arith.addf %46, %47 : vector<2x128xf32>
      %cst_20 = arith.constant 0.000000e+00 : f32
      %49 = vector.broadcast %cst_20 : f32 to vector<2x128xf32>
      %50 = arith.maximumf %48, %49 : vector<2x128xf32>
      %51 = tpu.iota {dimensions = array<i32: 1>} : vector<2x128xi32>
      %c128_i32_21 = arith.constant 128 : i32
      %52 = arith.muli %arg0, %c128_i32_21 : i32
      %53 = vector.broadcast %52 : i32 to vector<2x128xi32>
      %54 = arith.addi %51, %53 : vector<2x128xi32>
      %c8_i32_22 = arith.constant 8 : i32
      %55 = vector.broadcast %c8_i32_22 : i32 to vector<2x128xi32>
      %56 = arith.cmpi slt, %54, %55 : vector<2x128xi32>
      %cst_23 = arith.constant 0.000000e+00 : f32
      %57 = vector.broadcast %cst_23 : f32 to vector<2x128xf32>
      %58 = arith.select %56, %50, %57 : vector<2x128xi1>, vector<2x128xf32>
      %cst_24 = arith.constant dense<0.000000e+00> : vector<2xf32>
      %59 = vector.multi_reduction <add>, %58, %cst_24 [1] : vector<2x128xf32> to vector<2xf32>
      %60 = vector.shape_cast %59 : vector<2xf32> to vector<2x1xf32>
      %61 = vector.shape_cast %60 : vector<2x1xf32> to vector<2x1xf32>
      %62 = vector.broadcast %61 : vector<2x1xf32> to vector<2x128xf32>
      %c0_25 = arith.constant 0 : index
      %c0_26 = arith.constant 0 : index
      %63 = vector.load %arg7[%c0_25, %c0_26] : memref<2x128xf32, #tpu.memory_space<vmem>>, vector<2x128xf32>
      tpu.vector_store %arg7[%c0_25, %c0_26], %62 {strides = array<i32>} : memref<2x128xf32, #tpu.memory_space<vmem>>, vector<2x128xf32>,
    } else {
    }
    return
  }
  func.func @transform_0(%arg0: i32, %arg1: i32) -> i32 {
    %c0_i32 = arith.constant 0 : i32
    %c0_i32_0 = arith.constant 0 : i32
    return %c0_i32 : i32
  }
  func.func @transform_1(%arg0: i32, %arg1: i32) -> (i32, i32) {
    %c0_i32 = arith.constant 0 : i32
    %c0_i32_0 = arith.constant 0 : i32
    return %c0_i32, %arg1 : i32, i32
  }
  func.func @transform_2(%arg0: i32, %arg1: i32) -> (i32, i32) {
    %c0_i32 = arith.constant 0 : i32
    %c0_i32_0 = arith.constant 0 : i32
    return %c0_i32, %arg1 : i32, i32
  }
  func.func @transform_3(%arg0: i32, %arg1: i32) -> (i32, i32) {
    %c0_i32 = arith.constant 0 : i32
    %c0_i32_0 = arith.constant 0 : i32
    return %c0_i32, %arg0 : i32, i32
  }
  func.func @transform_4(%arg0: i32, %arg1: i32) -> (i32, i32) {
    %c0_i32 = arith.constant 0 : i32
    return %arg1, %arg0 : i32, i32
  }
  func.func @transform_5(%arg0: i32, %arg1: i32) -> (i32, i32) {
    %c0_i32 = arith.constant 0 : i32
    %c0_i32_0 = arith.constant 0 : i32
    return %c0_i32, %arg0 : i32, i32
  }
}

</mosaic_0001>

<llo_original>
// kernel: policy_forward.1
$region0: #{policy_forward.1}
  #allocation0 [shape = 'u32[]', space=smem, size = 0x4, offset = 0x4, fixed_abs, tag = 'smem constant byte address 0x4 - core index']
  #allocation1 [shape = 'u32[144,128]{1,0:T(1,128)}', space=vmem, size = 0x12000, scoped, tag = 'internal scratch']
  #allocation2 [shape = 'f32[2,128]{1,0:T(2,128)}', space=vmem, size = 0x400, scoped, tag = 'scratch operand']
  %s0 = inlined_call_operand.vmem [shape: f32[14], index: 0, kind: input, shape index: {}]
  %s1 = inlined_call_operand.vmem [shape: f32[2,128], index: 1, kind: input, shape index: {}]
  %s2 = inlined_call_operand.vmem [shape: f32[1,128], index: 2, kind: input, shape index: {}, may-alias: {2,3}]
  %s3 = inlined_call_operand.vmem [shape: f32[1,128], index: 3, kind: input, shape index: {}, may-alias: {2,3}]
  %s4 = inlined_call_operand.vmem [shape: f32[8,8], index: 4, kind: input, shape index: {}]
  %s5 = inlined_call_operand.vmem [shape: f32[2,128], index: 5, kind: output, shape index: {}]
  %s6 = sld [smem:[#allocation0]]
  $region42: #{policy_forward.1} parent=0
    _
  %s8 = ssub.s32 1, %s6
  %s9 = scalar_select 0, %s8, %s6
  $region1: #{policy_forward.1} parent=0
    #allocation3 [shape = 'u8[512]{0}', space=smem, size = 0x200, scoped, tag = 'input window, operand 0, single buffered']
    #allocation4 [shape = 's32[1]{0}', space=sflag, size = 0x4, scoped, tag = 'scoped memory for policy_forward.1']
    %10 = vsyncpa [#allocation4], 0
    // Predicated region
    $region2: #{policy_forward.1} parent=1 // pred_check
      _
    $region3: #{policy_forward.1} parent=1 // pred_check_branch
      %12 = sbr.rel (0) target = $region5
    $region4: #{policy_forward.1} parent=1 // pred_region
      %s14 = ssub.s32 16, 16
      %15 = vsyncadd [#allocation4], %s14
      %s17 = sshll.u32 %s0, 4
      %s18 = int_to_ptr.vmem [resolvable:$true] %s17
      %20 = dma.vmem_to_smem %s18, 16, [#allocation3], [#allocation4]
    $region5: #{policy_forward.1} parent=1 // pred_fallthru
      _
    // Predicated region
    $region6: #{policy_forward.1} parent=1 // pred_check
      _
    $region7: #{policy_forward.1} parent=1 // pred_check_branch
      %22 = sbr.rel (0) target = $region9
    $region8: #{policy_forward.1} parent=1 // pred_region
      _
    $region9: #{policy_forward.1} parent=1 // pred_fallthru
      _
    // Predicated region
    $region10: #{policy_forward.1} parent=1 // pred_check
      _
    $region11: #{policy_forward.1} parent=1 // pred_check_branch
      %24 = sbr.rel (0) target = $region13
    $region12: #{policy_forward.1} parent=1 // pred_region
      _
    $region13: #{policy_forward.1} parent=1 // pred_fallthru
      _
    // Predicated region
    $region14: #{policy_forward.1} parent=1 // pred_check
      _
    $region15: #{policy_forward.1} parent=1 // pred_check_branch
      %26 = sbr.rel (0) target = $region17
    $region16: #{policy_forward.1} parent=1 // pred_region
      _
    $region17: #{policy_forward.1} parent=1 // pred_fallthru
      _
    // Predicated region
    $region18: #{policy_forward.1} parent=1 // pred_check
      _
    $region19: #{policy_forward.1} parent=1 // pred_check_branch
      %28 = sbr.rel (0) target = $region21
    $region20: #{policy_forward.1} parent=1 // pred_region
      _
    $region21: #{policy_forward.1} parent=1 // pred_fallthru
      _
    // Predicated region
    $region22: #{policy_forward.1} parent=1 // pred_check
      _
    $region23: #{policy_forward.1} parent=1 // pred_check_branch
      %30 = sbr.rel (0) target = $region25
    $region24: #{policy_forward.1} parent=1 // pred_region
      %31 = dma.done [#allocation4], 16
    $region25: #{policy_forward.1} parent=1 // pred_fallthru
      _
    %32 = sfence
    %s33 = sld [smem:[#allocation3]]
    %s34 = sld [smem:[#allocation3 + $0x1]]
    %s35 = sld [smem:[#allocation3 + $0x2]]
    %s36 = sld [smem:[#allocation3 + $0x3]]
    %s37 = sld [smem:[#allocation3 + $0x4]]
    %s38 = sld [smem:[#allocation3 + $0x5]]
    %p39 = scmp.eq.s32.totalorder 0, 0
    // Predicated region
    $region26: #{policy_forward.1} parent=1 // pred_check
      %p40 = pneg %p39
    $region27: #{policy_forward.1} parent=1 // pred_check_branch
      %42 = sbr.rel (%p40) target = $region29
    $region28: #{policy_forward.1} parent=1 // pred_region
      %43 = vst [vmem:[#allocation2] sm:$0x3] 0.0
    $region29: #{policy_forward.1} parent=1 // pred_fallthru
      _
    %v44 = vld [vmem:[%s4] sm:$0xff]
    %v45 = vld [vmem:[%s4 + $0x8] sm:$0xff]
    %v46 = vld [vmem:[%s4 + $0x10] sm:$0xff]
    %v47 = vld [vmem:[%s4 + $0x18] sm:$0xff]
    %v48 = vld [vmem:[%s4 + $0x20] sm:$0xff]
    %v49 = vld [vmem:[%s4 + $0x28] sm:$0xff]
    %v50 = vld [vmem:[%s4 + $0x30] sm:$0xff]
    %v51 = vld [vmem:[%s4 + $0x38] sm:$0xff]
    %v52 = vld [vmem:[%s4 + $0x40] sm:$0xff]
    %v53 = vld [vmem:[%s4 + $0x48] sm:$0xff]
    %v54 = vld [vmem:[%s4 + $0x50] sm:$0xff]
    %v55 = vld [vmem:[%s4 + $0x58] sm:$0xff]
    %v56 = vld [vmem:[%s4 + $0x60] sm:$0xff]
    %v57 = vld [vmem:[%s4 + $0x68] sm:$0xff]
    %v58 = vld [vmem:[%s4 + $0x70] sm:$0xff]
    %v59 = vld [vmem:[%s4 + $0x78] sm:$0xff]
    %v60 = vlaneseq
    %v61 = vshrl.u32 %v60, 7
    %v62 = vadd.s32 %v61, 8
    %v63 = vadd.s32 %v61, 16
    %v64 = vadd.s32 %v61, 24
    %v65 = vadd.s32 %v61, 32
    %v66 = vadd.s32 %v61, 40
    %v67 = vadd.s32 %v61, 48
    %v68 = vadd.s32 %v61, 56
    %v69 = vadd.s32 %v61, 64
    %v70 = vadd.s32 %v61, 72
    %v71 = vadd.s32 %v61, 80
    %v72 = vadd.s32 %v61, 88
    %v73 = vadd.s32 %v61, 96
    %v74 = vadd.s32 %v61, 104
    %v75 = vadd.s32 %v61, 112
    %v76 = vadd.s32 %v61, 120
    %s77 = smul.u32 0, 128
    %v78 = vstv %s77
    %v79 = vadd.s32 %v61, %v78
    %v80 = vadd.s32 %v62, %v78
    %v81 = vadd.s32 %v63, %v78
    %v82 = vadd.s32 %v64, %v78
    %v83 = vadd.s32 %v65, %v78
    %v84 = vadd.s32 %v66, %v78
    %v85 = vadd.s32 %v67, %v78
    %v86 = vadd.s32 %v68, %v78
    %v87 = vadd.s32 %v69, %v78
    %v88 = vadd.s32 %v70, %v78
    %v89 = vadd.s32 %v71, %v78
    %v90 = vadd.s32 %v72, %v78
    %v91 = vadd.s32 %v73, %v78
    %v92 = vadd.s32 %v74, %v78
    %v93 = vadd.s32 %v75, %v78
    %v94 = vadd.s32 %v76, %v78
    %vm95 = vcmp.lt.s32.totalorder %v79, 8
    %vm96 = vcmp.lt.s32.totalorder %v80, 8
    %vm97 = vcmp.lt.s32.totalorder %v81, 8
    %vm98 = vcmp.lt.s32.totalorder %v82, 8
    %vm99 = vcmp.lt.s32.totalorder %v83, 8
    %vm100 = vcmp.lt.s32.totalorder %v84, 8
    %vm101 = vcmp.lt.s32.totalorder %v85, 8
    %vm102 = vcmp.lt.s32.totalorder %v86, 8
    %vm103 = vcmp.lt.s32.totalorder %v87, 8
    %vm104 = vcmp.lt.s32.totalorder %v88, 8
    %vm105 = vcmp.lt.s32.totalorder %v89, 8
    %vm106 = vcmp.lt.s32.totalorder %v90, 8
    %vm107 = vcmp.lt.s32.totalorder %v91, 8
    %vm108 = vcmp.lt.s32.totalorder %v92, 8
    %vm109 = vcmp.lt.s32.totalorder %v93, 8
    %vm110 = vcmp.lt.s32.totalorder %v94, 8
    %v111 = vsel %vm95, %v44, 0.0
    %v112 = vsel %vm96, %v45, 0.0
    %v113 = vsel %vm97, %v46, 0.0
    %v114 = vsel %vm98, %v47, 0.0
    %v115 = vsel %vm99, %v48, 0.0
    %v116 = vsel %vm100, %v49, 0.0
    %v117 = vsel %vm101, %v50, 0.0
    %v118 = vsel %vm102, %v51, 0.0
    %v119 = vsel %vm103, %v52, 0.0
    %v120 = vsel %vm104, %v53, 0.0
    %v121 = vsel %vm105, %v54, 0.0
    %v122 = vsel %vm106, %v55, 0.0
    %v123 = vsel %vm107, %v56, 0.0
    %v124 = vsel %vm108, %v57, 0.0
    %v125 = vsel %vm109, %v58, 0.0
    %v126 = vsel %vm110, %v59, 0.0
    %v127 = vld [vmem:[%s1] sm:$0x3]
    %v128 = vld [vmem:[%s2] sm:$0x1]
    %v129 = vstv %s33
    %v130 = vmul.f32 %v128, %v129
    %v132 = vlaneseq
    %v133 = vshrl.u32 %v132, 7
    %v134 = vsub.s32 0, %v133
    %v135 = vrot.slane %v130, %v134
    %v137 = vmul.f32 %v127, %v135
    %v138 = vld [vmem:[#allocation2] sm:$0x3]
    %139 = vmatprep.subr.mxu0 0.0
    %140 = vmatpush1.msra.mxu0 %v126
    %141 = vmatprep.subr.mxu0 0.0
    %142 = vmatpush1.msra.mxu0 %v125
    %143 = vmatprep.subr.mxu0 0.0
    %144 = vmatpush1.msra.mxu0 %v124
    %145 = vmatprep.subr.mxu0 0.0
    %146 = vmatpush1.msra.mxu0 %v123
    %147 = vmatprep.subr.mxu0 0.0
    %148 = vmatpush1.msra.mxu0 %v122
    %149 = vmatprep.subr.mxu0 0.0
    %150 = vmatpush1.msra.mxu0 %v121
    %151 = vmatprep.subr.mxu0 0.0
    %152 = vmatpush1.msra.mxu0 %v120
    %153 = vmatprep.subr.mxu0 0.0
    %154 = vmatpush1.msra.mxu0 %v119
    %155 = vmatprep.subr.mxu0 0.0
    %156 = vmatpush1.msra.mxu0 %v118
    %157 = vmatprep.subr.mxu0 0.0
    %158 = vmatpush1.msra.mxu0 %v117
    %159 = vmatprep.subr.mxu0 0.0
    %160 = vmatpush1.msra.mxu0 %v116
    %161 = vmatprep.subr.mxu0 0.0
    %162 = vmatpush1.msra.mxu0 %v115
    %163 = vmatprep.subr.mxu0 0.0
    %164 = vmatpush1.msra.mxu0 %v114
    %165 = vmatprep.subr.mxu0 0.0
    %166 = vmatpush1.msra.mxu0 %v113
    %167 = vmatprep.subr.mxu0 0.0
    %168 = vmatpush1.msra.mxu0 %v112
    %169 = vmatprep.subr.mxu0 0.0
    %170 = vmatpush1.msra.mxu0 %v111
    %171 = vmatprep.subr.mxu0 0.0
    %172 = vmatpush2.msra.mxu0 0.0
    %173 = vmatprep.subr.mxu0 0.0
    %174 = vmatpush2.msra.mxu0 0.0
    %175 = vmatprep.subr.mxu0 0.0
    %176 = vmatpush2.msra.mxu0 0.0
    %177 = vmatprep.subr.mxu0 0.0
    %178 = vmatpush2.msra.mxu0 0.0
    %179 = vmatprep.subr.mxu0 0.0
    %180 = vmatpush2.msra.mxu0 0.0
    %181 = vmatprep.subr.mxu0 0.0
    %182 = vmatpush2.msra.mxu0 0.0
    %183 = vmatprep.subr.mxu0 0.0
    %184 = vmatpush2.msra.mxu0 0.0
    %185 = vmatprep.subr.mxu0 0.0
    %186 = vmatpush2.msra.mxu0 0.0
    %187 = vmatprep.subr.mxu0 0.0
    %188 = vmatpush2.msra.mxu0 0.0
    %189 = vmatprep.subr.mxu0 0.0
    %190 = vmatpush2.msra.mxu0 0.0
    %191 = vmatprep.subr.mxu0 0.0
    %192 = vmatpush2.msra.mxu0 0.0
    %193 = vmatprep.subr.mxu0 0.0
    %194 = vmatpush2.msra.mxu0 0.0
    %195 = vmatprep.subr.mxu0 0.0
    %196 = vmatpush2.msra.mxu0 0.0
    %197 = vmatprep.subr.mxu0 0.0
    %198 = vmatpush2.msra.mxu0 0.0
    %199 = vmatprep.subr.mxu0 0.0
    %200 = vmatpush2.msra.mxu0 0.0
    %201 = vmatprep.subr.mxu0 0.0
    %202 = vmatpush2.msra.mxu0 0.0
    %203 = vmatprep.mubr.f32.mxu0 0.0
    %204 = vmatmul.mubr.f32.gmra.mxu0 %v137
    %v205 = vpop.f32.mrf.mxu0
    %v206 = vadd.f32 0.0, %v205
    %v207 = vpop.f32.mrf.mxu0
    %208 = vdwg.mxu0
    %v209 = vadd.f32 %v138, %v206
    %210 = vst [vmem:[#allocation2] sm:$0x3] %v209
    // Predicated region
    $region30: #{policy_forward.1} parent=1 // pred_check
      %p211 = pneg %p39
    $region31: #{policy_forward.1} parent=1 // pred_check_branch
      %213 = sbr.rel (%p211) target = $region33
    $region32: #{policy_forward.1} parent=1 // pred_region
      %v214 = vld [vmem:[#allocation2] sm:$0x3]
      %v215 = vld [vmem:[%s3] sm:$0x1]
      %v217 = vlaneseq
      %v218 = vshrl.u32 %v217, 7
      %v219 = vsub.s32 0, %v218
      %v220 = vrot.slane %v215, %v219
      %v222 = vmul.f32 %v214, %v220
      %v223 = vstv %s34
      %v224 = vadd.f32 %v222, %v223
      %v225 = vmax.f32 %v224, 0.0
      %v226 = vstv %s35
      %v227 = vmul.f32 %v225, %v226
      %v228 = vstv %s36
      %v229 = vadd.f32 %v227, %v228
      %v230 = vmax.f32 %v229, 0.0
      %v231 = vstv %s37
      %v232 = vmul.f32 %v230, %v231
      %v233 = vstv %s38
      %v234 = vadd.f32 %v232, %v233
      %v235 = vmax.f32 %v234, 0.0
      %v236 = vlaneseq
      %v237 = vand.u32 %v236, 127
      %s238 = smul.u32 0, 128
      %v239 = vstv %s238
      %v240 = vadd.s32 %v237, %v239
      %vm241 = vcmp.lt.s32.totalorder %v240, 8
      %v242 = vsel %vm241, %v235, 0.0
      %vm243 = vcmask 1041408
      %v244 = vsel %vm243, %v242, 0.0
      %245 = vadd.xlane.f32.xlu0 %v244
      %v246 = vpop.xlane.xlu0 %245
      %247 = vst [vmem:[%s5] sm:$0x3] %v246
    $region33: #{policy_forward.1} parent=1 // pred_fallthru
      _
    // Predicated region
    $region34: #{policy_forward.1} parent=1 // pred_check
      _
    $region35: #{policy_forward.1} parent=1 // pred_check_branch
      %249 = sbr.rel (0) target = $region37
    $region36: #{policy_forward.1} parent=1 // pred_region
      _
    $region37: #{policy_forward.1} parent=1 // pred_fallthru
      _
    // Predicated region
    $region38: #{policy_forward.1} parent=1 // pred_check
      _
    $region39: #{policy_forward.1} parent=1 // pred_check_branch
      %251 = sbr.rel (0) target = $region41
    $region40: #{policy_forward.1} parent=1 // pred_region
      _
    $region41: #{policy_forward.1} parent=1 // pred_fallthru
      _
    %252 = vsyncpa [#allocation4], 1

</llo_original>
